<compile_context>
chip_gen: v7x
topology: tpu7x:2x2x1
jax: 0.10.0
libtpu: 0.0.40
codegen_flags: <defaults>
</compile_context>

<pallas_src>
import functools

import jax
import jax.numpy as jnp
from jax.experimental import pallas as pl
from jax.experimental.pallas import tpu as pltpu


def _tpu_budgets():
    """Per-generation (block_budget, base_vmem_limit, dual_core)."""
    try:
        vmem = int(pltpu.get_tpu_info().vmem_capacity_bytes)
    except Exception:
        vmem = 64 * 1024 * 1024                     # conservative (v7x-sized)
    if vmem >= 96 * 1024 * 1024:                    # v5e / v6e: 128 MiB VMEM
        return 20 * 1024 * 1024, 100 * 1024 * 1024, False
    # v7x: 64 MiB per TensorCore, 2 TensorCores per chip.
    return 8 * 1024 * 1024, 44 * 1024 * 1024, True


def _sublane_step(dtype):
    """Cin-tile granularity so packed dtypes keep native sublane tiling."""
    return max(8, 32 // jnp.dtype(dtype).itemsize)  # f32->8, bf16->16, i8->32


def _pick_batch_tile(n, cin, cout, hw, in_item, out_item, budget, max_nb):
    """Largest divisor of n (<= max_nb) whose in/out blocks fit the budget."""
    best = 1
    for nb in range(1, min(n, max_nb) + 1):
        if n % nb:
            continue
        if (nb * cin * hw * in_item <= budget
                and nb * cout * hw * out_item <= budget):
            best = nb
    return best


def _pick_cin_tile(cin, nb, hw, in_item, budget, step):
    """Largest step-multiple divisor of cin whose x block fits the budget."""
    if nb * cin * hw * in_item <= budget:
        return cin
    best = None
    d = step
    while d < cin:
        if cin % d == 0 and nb * d * hw * in_item <= budget:
            best = d
        d += step
    if best is not None:
        return best
    # Fallback: smallest step-multiple divisor (keeps blocks as small as
    # possible instead of blowing up to the full Cin).
    d = step
    while d < cin:
        if cin % d == 0:
            return d
        d += step
    return cin


def _aspp_pooling_kernel(x_ref, wt_ref, o_ref, acc_ref, *, inv_hw, single_k):
    # x_ref:   (nb, tcin, HWp)  lane-dense input tile
    # wt_ref:  (Cin, Cout)      full weight, resident across the whole grid
    # o_ref:   (nb, Cout, HWp)  lane-dense output tile (resident across k)
    # acc_ref: (nb, Cout) f32   running 1x1-conv accumulator
    k = pl.program_id(1)
    tcin = x_ref.shape[1]

    @pl.when(k == 0)
    def _():
        acc_ref[...] = jnp.zeros_like(acc_ref)

    # Partial global-average pool: sum over flattened H*W (lane axis) with an
    # f32 accumulator; no f32 materialization of the whole x block.
    psum = jnp.sum(x_ref[...], axis=2, dtype=jnp.float32)            # (nb, tcin)

    # Partial 1x1 conv (no bias): (nb, tcin) @ (tcin, Cout) on the MXU, using
    # the k-th chunk of the resident weight (no per-step weight DMA).
    if single_k:
        w = wt_ref[...]
    else:
        start = pl.multiple_of(k * tcin, tcin)
        w = wt_ref[pl.ds(start, tcin), :]
    acc_ref[...] += jnp.dot(psum, w.astype(jnp.float32),
                            preferred_element_type=jnp.float32)      # (nb, Cout)

    @pl.when(k == pl.num_programs(1) - 1)
    def _():
        nb, cout, hw = o_ref.shape
        # ReLU + scale on the tiny accumulator, cast BEFORE the big broadcast.
        y = jnp.maximum(acc_ref[...] * inv_hw, 0.0).astype(o_ref.dtype)
        # Bilinear upsample from a 1x1 source == broadcast across H*W lanes.
        o_ref[...] = jnp.broadcast_to(y[:, :, None], (nb, cout, hw))


def aspp_pooling(x, weight):
    """x: (N, Cin, H, W); weight: (Cout, Cin).  Returns (N, Cout, H, W)."""
    N, Cin, H, W = x.shape
    Cout = weight.shape[0]
    HW = H * W
    HWp = ((HW + 127) // 128) * 128          # lane-dense, unmasked stores

    block_budget, vmem_limit, dual_core = _tpu_budgets()

    x2 = x.reshape(N, Cin, HW)
    if HWp != HW:
        x2 = jnp.pad(x2, ((0, 0), (0, 0), (0, HWp - HW)))   # zeros: safe for sum
    wt = jnp.swapaxes(weight, 0, 1)          # (Cin, Cout) for a plain matmul

    in_item = x.dtype.itemsize
    out_item = x.dtype.itemsize
    w_item = weight.dtype.itemsize

    # On v7x, keep >= 2 iterations on the parallel batch axis (2 TensorCores).
    max_nb = max(1, N // 2) if (dual_core and N >= 2) else N
    nb = _pick_batch_tile(N, Cin, Cout, HWp, in_item, out_item,
                          block_budget, max_nb)
    tcin = _pick_cin_tile(Cin, nb, HWp, in_item, block_budget,
                          _sublane_step(x.dtype))

    grid = (N // nb, Cin // tcin)            # reduction axis (Cin tiles) last
    single_k = (tcin == Cin)

    # Harden: make sure the chosen blocks provably fit the scoped VMEM limit
    # (double-buffered in/out, resident weight, accumulator, headroom).
    in_blk = nb * tcin * HWp * in_item
    out_blk = nb * Cout * HWp * out_item
    w_blk = Cin * Cout * w_item
    needed = 2 * in_blk + 2 * out_blk + 2 * w_blk + nb * Cout * 4 + (2 << 20)
    vmem_limit = max(vmem_limit, needed)

    kernel = functools.partial(_aspp_pooling_kernel,
                               inv_hw=1.0 / float(HW),   # true HW, not padded
                               single_k=single_k)

    cost = pl.CostEstimate(
        flops=2 * N * Cout * Cin + N * Cin * HW,
        transcendentals=0,
        bytes_accessed=(N * Cin * HWp * in_item
                        + N * Cout * HWp * out_item
                        + Cin * Cout * w_item),          # weight fetched once
    )

    out2 = pl.pallas_call(
        kernel,
        out_shape=jax.ShapeDtypeStruct((N, Cout, HWp), x.dtype),
        grid_spec=pltpu.PrefetchScalarGridSpec(
            num_scalar_prefetch=0,
            grid=grid,
            in_specs=[
                pl.BlockSpec((nb, tcin, HWp), lambda n, k: (n, k, 0)),
                # Resident weight: constant block index -> DMA'd once.
                pl.BlockSpec((Cin, Cout), lambda n, k: (0, 0)),
            ],
            out_specs=pl.BlockSpec((nb, Cout, HWp), lambda n, k: (n, 0, 0)),
            scratch_shapes=[pltpu.VMEM((nb, Cout), jnp.float32)],
        ),
        compiler_params=pltpu.CompilerParams(
            dimension_semantics=("parallel", "arbitrary"),
            vmem_limit_bytes=int(vmem_limit),
        ),
        cost_estimate=cost,
    )(x2, wt)

    if HWp != HW:
        out2 = out2[:, :, :HW]
    return out2.reshape(N, Cout, H, W)


def _reference(x, weight):
    pooled = jnp.mean(x.astype(jnp.float32), axis=(2, 3))            # (N, Cin)
    y = jnp.maximum(pooled @ weight.astype(jnp.float32).T, 0.0)      # (N, Cout)
    N, _, H, W = x.shape
    return jnp.broadcast_to(y[:, :, None, None],
                            (N, y.shape[1], H, W)).astype(x.dtype)


if __name__ == "__main__":
    key = jax.random.PRNGKey(0)
    kx, kw = jax.random.split(key)

    N, Cin, Cout, H, W = 2, 4, 8, 16, 16

    x = jax.random.normal(kx, (N, Cin, H, W), dtype=jnp.float32)
    # nn.Conv2d(Cin, Cout, 1, bias=False).weight is (Cout, Cin, 1, 1);
    # squeezed to (Cout, Cin) with a deterministic kaiming-uniform-ish init.
    fan_in = Cin  # 1x1 kernel
    bound = (6.0 / fan_in) ** 0.5
    weight = jax.random.uniform(kw, (Cout, Cin), jnp.float32, -bound, bound)

    out = jax.block_until_ready(aspp_pooling(x, weight))

    ref = _reference(x, weight)
    assert out.shape == (N, Cout, H, W)
    assert jnp.allclose(out, ref, atol=1e-5, rtol=1e-5)

    print("KERNEL_OK")
</pallas_src>

<mosaic_0001>
module attributes {stable_mosaic.version = 11 : i64} {
  func.func @_aspp_pooling_kernel(%arg0: i32, %arg1: i32, %arg2: memref<1x4x256xf32, #tpu.memory_space<vmem>>, %arg3: memref<4x8xf32, #tpu.memory_space<vmem>>, %arg4: memref<1x8x256xf32, #tpu.memory_space<vmem>>, %arg5: memref<1x8xf32, #tpu.memory_space<vmem>>) attributes {dimension_semantics = [#tpu.dimension_semantics<parallel>, #tpu.dimension_semantics<arbitrary>], iteration_bounds = array<i64: 2, 1>, scalar_prefetch = 0 : i64, scratch_operands = 1 : i64, tpu.core_type = #tpu.core_type<tc>, window_params = [{transform_indices = @transform_0, window_bounds = array<i64: 1, 4, 256>}, {pipeline_mode = #tpu.pipeline_mode<synchronous>, transform_indices = @transform_1, window_bounds = array<i64: 4, 8>}, {transform_indices = @transform_2, window_bounds = array<i64: 1, 8, 256>}]} {
    %c0_i32 = arith.constant 0 : i32
    %0 = arith.cmpi eq, %arg1, %c0_i32 : i32
    %1 = arith.extui %0 : i1 to i32
    %c0_i32_0 = arith.constant 0 : i32
    %2 = arith.cmpi ne, %1, %c0_i32_0 : i32
    scf.if %2 {
      %cst_12 = arith.constant 0.000000e+00 : f32
      %13 = vector.broadcast %cst_12 : f32 to vector<1x8xf32>
      %c0_13 = arith.constant 0 : index
      %c0_14 = arith.constant 0 : index
      %14 = vector.load %arg5[%c0_13, %c0_14] : memref<1x8xf32, #tpu.memory_space<vmem>>, vector<1x8xf32>
      tpu.vector_store %arg5[%c0_13, %c0_14], %13 {strides = array<i32>} : memref<1x8xf32, #tpu.memory_space<vmem>>, vector<1x8xf32>,
    } else {
    }
    %c0 = arith.constant 0 : index
    %c0_1 = arith.constant 0 : index
    %c0_2 = arith.constant 0 : index
    %3 = vector.load %arg2[%c0, %c0_1, %c0_2] : memref<1x4x256xf32, #tpu.memory_space<vmem>>, vector<1x4x256xf32>
    %cst = arith.constant dense<0.000000e+00> : vector<1x4xf32>
    %4 = vector.multi_reduction <add>, %3, %cst [2] : vector<1x4x256xf32> to vector<1x4xf32>
    %c0_3 = arith.constant 0 : index
    %c0_4 = arith.constant 0 : index
    %5 = vector.load %arg3[%c0_3, %c0_4] : memref<4x8xf32, #tpu.memory_space<vmem>>, vector<4x8xf32>
    %c0_5 = arith.constant 0 : index
    %c0_6 = arith.constant 0 : index
    %6 = vector.load %arg5[%c0_5, %c0_6] : memref<1x8xf32, #tpu.memory_space<vmem>>, vector<1x8xf32>
    %cst_7 = arith.constant dense<0.000000e+00> : vector<1x8xf32>
    %7 = tpu.matmul %4, %5, %cst_7 {dimension_numbers = #tpu.dot_dimension_numbers<[1], [0], [0], [1], [0, 0, 1, 1], [], []>} : vector<1x4xf32>, vector<4x8xf32>, vector<1x8xf32> -> vector<1x8xf32>
    %8 = arith.addf %6, %7 : vector<1x8xf32>
    %c0_8 = arith.constant 0 : index
    %c0_9 = arith.constant 0 : index
    %9 = vector.load %arg5[%c0_8, %c0_9] : memref<1x8xf32, #tpu.memory_space<vmem>>, vector<1x8xf32>
    tpu.vector_store %arg5[%c0_8, %c0_9], %8 {strides = array<i32>} : memref<1x8xf32, #tpu.memory_space<vmem>>, vector<1x8xf32>,
    %c0_i32_10 = arith.constant 0 : i32
    %10 = arith.cmpi eq, %arg1, %c0_i32_10 : i32
    %11 = arith.extui %10 : i1 to i32
    %c0_i32_11 = arith.constant 0 : i32
    %12 = arith.cmpi ne, %11, %c0_i32_11 : i32
    scf.if %12 {
      %c0_12 = arith.constant 0 : index
      %c0_13 = arith.constant 0 : index
      %13 = vector.load %arg5[%c0_12, %c0_13] : memref<1x8xf32, #tpu.memory_space<vmem>>, vector<1x8xf32>
      %cst_14 = arith.constant 3.906250e-03 : f32
      %14 = vector.broadcast %cst_14 : f32 to vector<1x8xf32>
      %15 = arith.mulf %13, %14 : vector<1x8xf32>
      %cst_15 = arith.constant 0.000000e+00 : f32
      %16 = vector.broadcast %cst_15 : f32 to vector<1x8xf32>
      %17 = arith.maximumf %15, %16 : vector<1x8xf32>
      %18 = vector.shape_cast %17 : vector<1x8xf32> to vector<1x8x1xf32>
      %19 = vector.shape_cast %18 : vector<1x8x1xf32> to vector<1x8x1xf32>
      %20 = vector.broadcast %19 : vector<1x8x1xf32> to vector<1x8x256xf32>
      %c0_16 = arith.constant 0 : index
      %c0_17 = arith.constant 0 : index
      %c0_18 = arith.constant 0 : index
      %21 = vector.load %arg4[%c0_16, %c0_17, %c0_18] : memref<1x8x256xf32, #tpu.memory_space<vmem>>, vector<1x8x256xf32>
      tpu.vector_store %arg4[%c0_16, %c0_17, %c0_18], %20 {strides = array<i32>} : memref<1x8x256xf32, #tpu.memory_space<vmem>>, vector<1x8x256xf32>,
    } else {
    }
    return
  }
  func.func @transform_0(%arg0: i32, %arg1: i32) -> (i32, i32, i32) {
    %c0_i32 = arith.constant 0 : i32
    %c0_i32_0 = arith.constant 0 : i32
    return %arg0, %arg1, %c0_i32 : i32, i32, i32
  }
  func.func @transform_1(%arg0: i32, %arg1: i32) -> (i32, i32) {
    %c0_i32 = arith.constant 0 : i32
    %c0_i32_0 = arith.constant 0 : i32
    %c0_i32_1 = arith.constant 0 : i32
    return %c0_i32, %c0_i32_0 : i32, i32
  }
  func.func @transform_2(%arg0: i32, %arg1: i32) -> (i32, i32, i32) {
    %c0_i32 = arith.constant 0 : i32
    %c0_i32_0 = arith.constant 0 : i32
    %c0_i32_1 = arith.constant 0 : i32
    return %arg0, %c0_i32, %c0_i32_0 : i32, i32, i32
  }
}

</mosaic_0001>

<llo_original>
// kernel: tpu_custom_call.1
$region0: #{tpu_custom_call.1}
  #allocation0 [shape = 'u32[]', space=smem, size = 0x4, offset = 0x4, fixed_abs, tag = 'smem constant byte address 0x4 - core index']
  #allocation1 [shape = 'u32[144,128]{1,0:T(1,128)}', space=vmem, size = 0x12000, scoped, tag = 'internal scratch']
  #allocation2 [shape = 'f32[1,8]{1,0:T(1,128)}', space=vmem, size = 0x200, scoped, tag = 'scratch operand']
  %s0 = inlined_call_operand.hbm [shape: f32[2,4,256], index: 0, kind: input, shape index: {}]
  %s1 = inlined_call_operand.hbm [shape: f32[4,8], index: 1, kind: input, shape index: {}]
  %s2 = inlined_call_operand.hbm [shape: f32[2,8,256], index: 2, kind: output, shape index: {}]
  %s3 = sld [smem:[#allocation0]]
  $region57: #{tpu_custom_call.1} parent=0
    _
  %s5 = ssub.s32 1, %s3
  %s6 = scalar_select 0, %s5, %s3
  $region1: #{tpu_custom_call.1} parent=0
    #allocation3 [shape = 'u8[8192]{0}', space=vmem, size = 0x2000, scoped, tag = 'input window, operand 0']
    #allocation4 [shape = 's32[2]{0}', space=sflag, size = 0x8, scoped, tag = 'scoped memory for tpu_custom_call.1']
    #allocation5 [shape = 's32[2]{0}', space=sflag, size = 0x8, scoped, tag = 'scoped memory for tpu_custom_call.1']
    #allocation6 [shape = 'u8[2048]{0}', space=vmem, size = 0x800, scoped, tag = 'input window, operand 1, single buffered']
    #allocation7 [shape = 's32[1]{0}', space=sflag, size = 0x4, scoped, tag = 'scoped memory for tpu_custom_call.1']
    #allocation8 [shape = 'u8[16384]{0}', space=vmem, size = 0x4000, scoped, tag = 'output window, operand 0']
    %7 = vsyncpa [#allocation4], 0
    %s8 = scalar_lea.sflag [#allocation4], 1
    %9 = vsyncpa %s8, 0
    %10 = vsyncpa [#allocation7], 0
    %11 = vsyncpa [#allocation5], 0
    %s12 = scalar_lea.sflag [#allocation5], 1
    %13 = vsyncpa %s12, 0
    loop: start=0, step=1, limit=4
    $region2: #{tpu_custom_call.1} parent=1 // loop_pre_header
      _
    $region3: #{tpu_custom_call.1} parent=1 // loop_header
      %s15 = sphi 0, %s19
      %p16 = scmp.ge.s32.totalorder %s15, 4
      %s22 = sphi 0, %s34
      %s23 = sphi 0, %s30
      %s24 = sphi 0, %s22
      %s25 = sphi 0, %s23
      %s26 = sphi 0, %s24
      %s27 = sphi 0, %s25
      %s39 = sphi 0, %s41
      %s42 = sphi 0, %s39
      %s43 = sphi 0, %s42
      %s59 = sphi 0, %s43
      %s63 = sphi 0, %s63
      %s65 = sphi 0, %s63
      %s66 = sphi 0, %s65
      %s80 = sphi 0, %s66
      %s86 = sphi 0, %s88
      %s89 = sphi 0, %s86
      %s90 = sphi 0, %s89
      %s106 = sphi 0, %s90
    $region4: #{tpu_custom_call.1} parent=1 // loop_header_branch
      %18 = sbr.rel (%p16) target = $region8
    $region5: #{tpu_custom_call.1} parent=1 // loop_body
      %s20 = ssub.s32 %s15, 1
      %s21 = ssub.s32 %s15, 2
      %s28 = sadd.s32 1, %s23
      %p29 = scmp.ge.s32.totalorder %s28, 1
      %s30 = scalar_select %p29, 0, %s28
      %s31 = sadd.s32 1, %s22
      %s32 = scalar_select %p29, %s31, %s22
      %p33 = scmp.ge.s32.totalorder %s32, 2
      %s34 = scalar_select %p33, 0, %s32
      %s35 = ssub.s32 %s22, %s34
      %s36 = ssub.s32 %s23, %s30
      %s37 = sor.u32 %s35, %s36
      %p38 = scmp.eq.s32.totalorder %s37, 0
      %s40 = sadd.s32 %s39, 1
      %s41 = scalar_select %p38, %s39, %s40
      %p44 = pneg %p38
      %p45 = scmp.eq.s32.totalorder %s15, 1
      %p46 = por %p44, %p45
      %p47 = scmp.ne.s32.totalorder %s39, %s42
      %p48 = scmp.eq.s32.totalorder %s15, 0
      %p49 = por %p47, %p48
      %p50 = scmp.ne.s32.totalorder %s39, %s42
      %p51 = scmp.eq.s32.totalorder %s20, 1
      %p52 = por %p50, %p51
      %p53 = scmp.ne.s32.totalorder %s42, %s43
      %p54 = scmp.eq.s32.totalorder %s20, 0
      %p55 = por %p53, %p54
      %p56 = scmp.ne.s32.totalorder %s42, %s43
      %p57 = scmp.eq.s32.totalorder %s21, 1
      %p58 = por %p56, %p57
      %p60 = scmp.ne.s32.totalorder %s43, %s59
      %p61 = scmp.eq.s32.totalorder %s21, 0
      %p62 = por %p60, %p61
      %s64 = sadd.s32 %s63, 1
      %p67 = scmp.eq.s32.totalorder %s15, 1
      %p68 = scmp.ne.s32.totalorder %s63, %s65
      %p69 = scmp.eq.s32.totalorder %s15, 0
      %p70 = por %p68, %p69
      %p71 = scmp.ne.s32.totalorder %s63, %s65
      %p72 = scmp.eq.s32.totalorder %s20, 1
      %p73 = por %p71, %p72
      %p74 = scmp.ne.s32.totalorder %s65, %s66
      %p75 = scmp.eq.s32.totalorder %s20, 0
      %p76 = por %p74, %p75
      %p77 = scmp.ne.s32.totalorder %s65, %s66
      %p78 = scmp.eq.s32.totalorder %s21, 1
      %p79 = por %p77, %p78
      %p81 = scmp.ne.s32.totalorder %s66, %s80
      %p82 = scmp.eq.s32.totalorder %s21, 0
      %p83 = por %p81, %p82
      %s84 = ssub.s32 %s22, %s34
      %p85 = scmp.eq.s32.totalorder %s84, 0
      %s87 = sadd.s32 %s86, 1
      %s88 = scalar_select %p85, %s86, %s87
      %p91 = pneg %p85
      %p92 = scmp.eq.s32.totalorder %s15, 1
      %p93 = por %p91, %p92
      %p94 = scmp.ne.s32.totalorder %s86, %s89
      %p95 = scmp.eq.s32.totalorder %s15, 0
      %p96 = por %p94, %p95
      %p97 = scmp.ne.s32.totalorder %s86, %s89
      %p98 = scmp.eq.s32.totalorder %s20, 1
      %p99 = por %p97, %p98
      %p100 = scmp.ne.s32.totalorder %s89, %s90
      %p101 = scmp.eq.s32.totalorder %s20, 0
      %p102 = por %p100, %p101
      %p103 = scmp.ne.s32.totalorder %s89, %s90
      %p104 = scmp.eq.s32.totalorder %s21, 1
      %p105 = por %p103, %p104
      %p107 = scmp.ne.s32.totalorder %s90, %s106
      %p108 = scmp.eq.s32.totalorder %s21, 0
      %p109 = por %p107, %p108
      %p110 = scmp.le.s32.totalorder 1, %s15
      %p111 = scmp.lt.s32.totalorder %s15, 3
      %p112 = pnand %p110, %p111
      %p113 = pneg %p112
      // Predicated region
      $region9: #{tpu_custom_call.1} parent=5 // pred_check
        _
      $region10: #{tpu_custom_call.1} parent=5 // pred_check_branch
        %115 = sbr.rel (%p112) target = $region12
      $region11: #{tpu_custom_call.1} parent=5 // pred_region
        %s116 = ssub.s32 %s15, 1
        // Predicated region
        $region13: #{tpu_custom_call.1} parent=11 // pred_check
          %p117 = pneg %p76
        $region14: #{tpu_custom_call.1} parent=11 // pred_check_branch
          %119 = sbr.rel (%p117) target = $region16
        $region15: #{tpu_custom_call.1} parent=11 // pred_region
          %s121 = ssub.s32 64, 64
          %122 = vsyncadd [#allocation7], %s121
          %s124 = sshll.u32 [#allocation6], 4
          %s125 = int_to_ptr.vmem [resolvable:$true] %s124
          %127 = dma.hbm_to_vmem [thread:$0]  %s1, 64, %s125, [#allocation7]
        $region16: #{tpu_custom_call.1} parent=11 // pred_fallthru
          _
      $region12: #{tpu_custom_call.1} parent=5 // pred_fallthru
        _
      %p128 = scmp.lt.s32.totalorder %s15, 2
      // Predicated region
      $region17: #{tpu_custom_call.1} parent=5 // pred_check
        %p129 = pneg %p128
      $region18: #{tpu_custom_call.1} parent=5 // pred_check_branch
        %131 = sbr.rel (%p129) target = $region20
      $region19: #{tpu_custom_call.1} parent=5 // pred_region
        // Predicated region
        $region21: #{tpu_custom_call.1} parent=19 // pred_check
          %p132 = pneg %p49
        $region22: #{tpu_custom_call.1} parent=19 // pred_check_branch
          %134 = sbr.rel (%p132) target = $region24
        $region23: #{tpu_custom_call.1} parent=19 // pred_region
          %s135 = sand.u32 %s39, 1
          %s136 = scalar_lea.sflag [#allocation4], %s135
          %s137 = sand.u32 %s39, 1
          %s138 = smul.addr %s137, 8
          %s139 = scalar_lea.vmem [#allocation3], %s138
          %s141 = ssub.s32 128, 128
          %142 = vsyncadd %s136, %s141
          %s143 = smul.addr %s23, 2
          %s144 = smul.addr %s22, 2
          %s145 = sadd.s32 %s143, %s144
          %s146 = smul.addr %s145, 64
          %s147 = scalar_lea.hbm %s0, %s146
          %s149 = sshll.u32 %s139, 4
          %s150 = int_to_ptr.vmem [resolvable:$true] %s149
          %152 = dma.hbm_to_vmem [thread:$0]  %s147, 128, %s150, %s136
        $region24: #{tpu_custom_call.1} parent=19 // pred_fallthru
          _
      $region20: #{tpu_custom_call.1} parent=5 // pred_fallthru
        _
      %p153 = scmp.le.s32.totalorder 1, %s15
      %p154 = scmp.lt.s32.totalorder %s15, 3
      %p155 = pnand %p153, %p154
      %p156 = pneg %p155
      // Predicated region
      $region25: #{tpu_custom_call.1} parent=5 // pred_check
        _
      $region26: #{tpu_custom_call.1} parent=5 // pred_check_branch
        %158 = sbr.rel (%p155) target = $region28
      $region27: #{tpu_custom_call.1} parent=5 // pred_region
        %s159 = ssub.s32 %s15, 1
        %s160 = sand.u32 %s42, 1
        %s161 = scalar_lea.sflag [#allocation4], %s160
        %s162 = sand.u32 %s42, 1
        %s163 = smul.addr %s162, 8
        %s164 = scalar_lea.vmem [#allocation3], %s163
        // Predicated region
        $region29: #{tpu_custom_call.1} parent=27 // pred_check
          %p165 = pneg %p55
        $region30: #{tpu_custom_call.1} parent=27 // pred_check_branch
          %167 = sbr.rel (%p165) target = $region32
        $region31: #{tpu_custom_call.1} parent=27 // pred_region
          %168 = dma.done %s161, 128
        $region32: #{tpu_custom_call.1} parent=27 // pred_fallthru
          _
        // Predicated region
        $region33: #{tpu_custom_call.1} parent=27 // pred_check
          %p169 = pneg %p76
        $region34: #{tpu_custom_call.1} parent=27 // pred_check_branch
          %171 = sbr.rel (%p169) target = $region36
        $region35: #{tpu_custom_call.1} parent=27 // pred_region
          %172 = dma.done [#allocation7], 64
        $region36: #{tpu_custom_call.1} parent=27 // pred_fallthru
          _
        %s173 = sand.u32 %s42, 1
        %s174 = scalar_lea.sflag [#allocation4], %s173
        %s175 = sand.u32 %s42, 1
        %s176 = smul.addr %s175, 8
        %s177 = scalar_lea.vmem [#allocation3], %s176
        %p178 = pneg %p55
        %p179 = pneg %p52
        %p180 = pneg %p76
        %p181 = pneg %p73
        %p182 = pneg %p102
        %p183 = pneg %p99
        %s184 = sand.u32 %s89, 1
        %s185 = scalar_lea.sflag [#allocation5], %s184
        %s186 = sand.u32 %s89, 1
        %s187 = smul.addr %s186, 16
        %s188 = scalar_lea.vmem [#allocation8], %s187
        %p189 = scmp.eq.s32.totalorder %s25, 0
        // Predicated region
        $region37: #{tpu_custom_call.1} parent=27 // pred_check
          %p190 = pneg %p189
        $region38: #{tpu_custom_call.1} parent=27 // pred_check_branch
          %192 = sbr.rel (%p190) target = $region40
        $region39: #{tpu_custom_call.1} parent=27 // pred_region
          %vm193 = vcmask 57344
          %194 = vst.msk [vmem:[#allocation2] sm:$0x1] %vm193, 0.0
        $region40: #{tpu_custom_call.1} parent=27 // pred_fallthru
          _
        %v195 = vld [vmem:[%s164] sm:$0xff]
        %v197 = vcombine.high %v195, %v195
        %vm199 = vcmask 1043456
        %v200 = vsel %vm199, %v195, 0.0
        %v201 = vsel %vm199, %v197, 0.0
        %v202 = vadd.f32 %v200, %v201
        %203 = vadd.xlane.f32.xlu0 %v202
        %v204 = vpop.xlane.xlu0 %203
        %v205 = vld [vmem:[#allocation6] sm:$0xf]
        %v206 = vld [vmem:[#allocation2] sm:$0x1]
        %v208 = vlaneseq
        %v209 = vand.u32 %v208, 127
        %v210 = vlaneseq
        %v211 = vshrl.u32 %v210, 7
        %v212 = vsub.s32 %v209, %v211
        %v213 = vrot.slane %v204, %v212
        %vm214 = vcmask 31744
        %v215 = vsel %vm214, %v213, 0
        %v218 = vsel %vm199, %v205, 0
        %220 = vmatprep.subr.mxu0 0.0
        %221 = vmatpush1.msra.mxu0 %v218
        %222 = vmatprep.subr.mxu0 0.0
        %223 = vmatpush1.msra.mxu0 0.0
        %224 = vmatprep.subr.mxu0 0.0
        %225 = vmatpush1.msra.mxu0 0.0
        %226 = vmatprep.subr.mxu0 0.0
        %227 = vmatpush1.msra.mxu0 0.0
        %228 = vmatprep.subr.mxu0 0.0
        %229 = vmatpush1.msra.mxu0 0.0
        %230 = vmatprep.subr.mxu0 0.0
        %231 = vmatpush1.msra.mxu0 0.0
        %232 = vmatprep.subr.mxu0 0.0
        %233 = vmatpush1.msra.mxu0 0.0
        %234 = vmatprep.subr.mxu0 0.0
        %235 = vmatpush1.msra.mxu0 0.0
        %236 = vmatprep.subr.mxu0 0.0
        %237 = vmatpush1.msra.mxu0 0.0
        %238 = vmatprep.subr.mxu0 0.0
        %239 = vmatpush1.msra.mxu0 0.0
        %240 = vmatprep.subr.mxu0 0.0
        %241 = vmatpush1.msra.mxu0 0.0
        %242 = vmatprep.subr.mxu0 0.0
        %243 = vmatpush1.msra.mxu0 0.0
        %244 = vmatprep.subr.mxu0 0.0
        %245 = vmatpush1.msra.mxu0 0.0
        %246 = vmatprep.subr.mxu0 0.0
        %247 = vmatpush1.msra.mxu0 0.0
        %248 = vmatprep.subr.mxu0 0.0
        %249 = vmatpush1.msra.mxu0 0.0
        %250 = vmatprep.subr.mxu0 0.0
        %251 = vmatpush1.msra.mxu0 0.0
        %252 = vmatprep.subr.mxu0 0.0
        %253 = vmatpush1.msra.mxu0 0.0
        %254 = vmatprep.subr.mxu0 0.0
        %255 = vmatpush1.msra.mxu0 0.0
        %256 = vmatprep.subr.mxu0 0.0
        %257 = vmatpush1.msra.mxu0 0.0
        %258 = vmatprep.subr.mxu0 0.0
        %259 = vmatpush1.msra.mxu0 0.0
        %260 = vmatprep.subr.mxu0 0.0
        %261 = vmatpush1.msra.mxu0 0.0
        %262 = vmatprep.subr.mxu0 0.0
        %263 = vmatpush1.msra.mxu0 0.0
        %264 = vmatprep.subr.mxu0 0.0
        %265 = vmatpush1.msra.mxu0 0.0
        %266 = vmatprep.subr.mxu0 0.0
        %267 = vmatpush1.msra.mxu0 0.0
        %268 = vmatprep.subr.mxu0 0.0
        %269 = vmatpush1.msra.mxu0 0.0
        %270 = vmatprep.subr.mxu0 0.0
        %271 = vmatpush1.msra.mxu0 0.0
        %272 = vmatprep.subr.mxu0 0.0
        %273 = vmatpush1.msra.mxu0 0.0
        %274 = vmatprep.subr.mxu0 0.0
        %275 = vmatpush1.msra.mxu0 0.0
        %276 = vmatprep.subr.mxu0 0.0
        %277 = vmatpush1.msra.mxu0 0.0
        %278 = vmatprep.subr.mxu0 0.0
        %279 = vmatpush1.msra.mxu0 0.0
        %280 = vmatprep.subr.mxu0 0.0
        %281 = vmatpush1.msra.mxu0 0.0
        %282 = vmatprep.subr.mxu0 0.0
        %283 = vmatpush1.msra.mxu0 0.0
        %284 = vmatprep.mubr.f32.mxu0 0.0
        %285 = vmatmul.mubr.f32.gmra.mrb[0].mxu0 %v215
        %v286 = vpop.f32.mrb[0].mxu0
        %v287 = vadd.f32 0.0, %v286
        %v288 = vpop.f32.mrb[0].mxu0
        %289 = vdwg.mxu0
        %v290 = vadd.f32 %v206, %v287
        %vm291 = vcmask 57344
        %292 = vst.msk [vmem:[#allocation2] sm:$0x1] %vm291, %v290
        // Predicated region
        $region41: #{tpu_custom_call.1} parent=27 // pred_check
          %p293 = pneg %p189
        $region42: #{tpu_custom_call.1} parent=27 // pred_check_branch
          %295 = sbr.rel (%p293) target = $region44
        $region43: #{tpu_custom_call.1} parent=27 // pred_region
          %v296 = vld [vmem:[#allocation2] sm:$0x1]
          %v297 = vmul.f32 %v296, 0.00390625
          %v298 = vmax.f32 %v297, 0.0
          %v299 = vlaneseq
          %v300 = vshrl.u32 %v299, 7
          %v301 = vsub.s32 0, %v300
          %v302 = vrot.slane %v298, %v301
          %304 = vbcast.lane.b32.xlu0 %v302, 256
          %v305 = vpop.permute.xlu0 %304
          %306 = vst [vmem:[%s188] sm:$0xff] %v305
          %307 = vst [vmem:[%s188 + $0x8] sm:$0xff] %v305
        $region44: #{tpu_custom_call.1} parent=27 // pred_fallthru
          _
        %s308 = sand.u32 %s89, 1
        %s309 = scalar_lea.sflag [#allocation5], %s308
        %s310 = sand.u32 %s89, 1
        %s311 = smul.addr %s310, 16
        %s312 = scalar_lea.vmem [#allocation8], %s311
        // Predicated region
        $region45: #{tpu_custom_call.1} parent=27 // pred_check
          %p313 = pneg %p99
        $region46: #{tpu_custom_call.1} parent=27 // pred_check_branch
          %315 = sbr.rel (%p313) target = $region48
        $region47: #{tpu_custom_call.1} parent=27 // pred_region
          %s317 = ssub.s32 256, 256
          %318 = vsyncadd %s309, %s317
          %s319 = smul.addr %s24, 2
          %s320 = smul.addr %s319, 128
          %s321 = scalar_lea.hbm %s2, %s320
          %s323 = sshll.u32 %s312, 4
          %s324 = int_to_ptr.vmem [resolvable:$true] %s323
          %326 = dma.vmem_to_hbm [thread:$0]  %s324, 256, %s321, %s309
        $region48: #{tpu_custom_call.1} parent=27 // pred_fallthru
          _
      $region28: #{tpu_custom_call.1} parent=5 // pred_fallthru
        _
      %p327 = scmp.le.s32.totalorder 2, %s15
      // Predicated region
      $region49: #{tpu_custom_call.1} parent=5 // pred_check
        %p328 = pneg %p327
      $region50: #{tpu_custom_call.1} parent=5 // pred_check_branch
        %330 = sbr.rel (%p328) target = $region52
      $region51: #{tpu_custom_call.1} parent=5 // pred_region
        %s331 = ssub.s32 %s15, 2
        // Predicated region
        $region53: #{tpu_custom_call.1} parent=51 // pred_check
          %p332 = pneg %p105
        $region54: #{tpu_custom_call.1} parent=51 // pred_check_branch
          %334 = sbr.rel (%p332) target = $region56
        $region55: #{tpu_custom_call.1} parent=51 // pred_region
          %s335 = sand.u32 %s90, 1
          %s336 = scalar_lea.sflag [#allocation5], %s335
          %s337 = sand.u32 %s90, 1
          %s338 = smul.addr %s337, 16
          %s339 = scalar_lea.vmem [#allocation8], %s338
          %340 = dma.done %s336, 256
        $region56: #{tpu_custom_call.1} parent=51 // pred_fallthru
          _
      $region52: #{tpu_custom_call.1} parent=5 // pred_fallthru
        _
    $region6: #{tpu_custom_call.1} parent=1 // loop_footer
      %s19 = sadd.s32 1, %s15
    $region7: #{tpu_custom_call.1} parent=1 // loop_footer_branch
      %14 = sbr.rel target = $region3
    $region8: #{tpu_custom_call.1} parent=1 // loop_exit
      _
    %341 = vsyncpa [#allocation4], 1
    %s342 = scalar_lea.sflag [#allocation4], 1
    %343 = vsyncpa %s342, 1
    %344 = vsyncpa [#allocation7], 1
    %345 = vsyncpa [#allocation5], 1
    %s346 = scalar_lea.sflag [#allocation5], 1
    %347 = vsyncpa %s346, 1

</llo_original>
